<compile_context>
chip_gen: v7x
topology: tpu7x:2x2x1
jax: 0.10.0
libtpu: 0.0.40
codegen_flags: <defaults>
</compile_context>

<pallas_src>
import numpy as np
import jax
import jax.numpy as jnp
from jax.experimental import pallas as pl
from jax.experimental.pallas import tpu as pltpu  # noqa: F401  (not needed at this size)

# ---- "args" (small, deterministic config) ----------------------------------
BATCH = 2
SENT_LEN = 16          # args.sentence_length
HIDDEN = 32            # args.hidden_dim
FILTERS = (3, 4, 5)    # args.filters
FILTER_NUM = 8         # args.filter_num
LABEL_NUM = 4          # args.label_num
BETA = 0.9             # args.beta
THRESHOLD = 0.5        # args.threshold

MAX_FS = max(FILTERS)
CTOT = len(FILTERS) * FILTER_NUM         # 24  total conv channels
OUT_W = CTOT + 2 * LABEL_NUM             # 32  spks1 | spk2 | mem2
KCOL = MAX_FS * HIDDEN                   # 160 im2col contraction dim
M_ROWS = BATCH * SENT_LEN                # 32  batch folded into matmul M (16/ batch)

# Constants-slab row layout (lane width CTOT); every section 8-row aligned.
R_WCOL = 0                               # [0,160)  im2col conv weight
R_POOL = R_WCOL + KCOL                   # [160,192) pool weights (mask * 1/t_out)
R_BCONV = R_POOL + M_ROWS                # row 192   conv bias
R_WFC = R_BCONV + 8                      # [200,204) fc weight (out_features rows)
R_BFC = R_WFC + 8                        # row 208   fc bias (lanes [0,LABEL_NUM))
CONST_ROWS = R_BFC + 8                   # 216

# TODO(synk): dead_neuron_checker / Monitor.add_monitor is a host-side logging
# side effect with no output contribution; not implemented.


def _spike(v):
    # snntorch fast_sigmoid heaviside forward: (mem - threshold > 0).float()
    return jnp.where(v > 0.0, 1.0, 0.0).astype(jnp.float32)


def snn_textcnn_kernel(x_ref, c_ref, out_ref):
    x = x_ref[...]                                           # (M_ROWS, HIDDEN) f32

    # --- conv: 5 per-tap accumulating MXU dots (in-kernel im2col) -----------
    # Tap i needs x rows shifted up by i; shifted-in tail rows only ever feed
    # conv positions that are either masked out of the pooling or hit a
    # zero-padded (dead) weight tap, so they never affect the result.
    acc = jnp.zeros((M_ROWS, CTOT), jnp.float32)
    for i in range(MAX_FS):
        if i == 0:
            x_i = x
        else:
            x_i = jnp.concatenate(
                [x[i:, :], jnp.zeros((i, HIDDEN), jnp.float32)], axis=0)
        w_i = c_ref[R_WCOL + i * HIDDEN:R_WCOL + (i + 1) * HIDDEN, :]  # (H, CTOT)
        acc = acc + jnp.dot(x_i, w_i, preferred_element_type=jnp.float32)
    conv = acc + c_ref[R_BCONV:R_BCONV + 1, :]               # (M_ROWS, CTOT)

    # --- middle Leaky LIFs (fresh state, one step): mem = conv --------------
    spk_mid = _spike(conv - THRESHOLD)                       # (M_ROWS, CTOT)

    # --- masked AvgPool: VPU multiply by (mask * 1/t_out), then one aligned
    #     sublane reduce (XLU) per batch segment. No MXU hop, no casts.
    poolw = c_ref[R_POOL:R_POOL + M_ROWS, :]                 # (M_ROWS, CTOT)
    weighted = spk_mid * poolw
    pooled = jnp.concatenate(
        [jnp.sum(weighted[b * SENT_LEN:(b + 1) * SENT_LEN, :],
                 axis=0, keepdims=True) for b in range(BATCH)],
        axis=0)                                              # (BATCH, CTOT)

    # --- lif1: ONE shared Leaky; membrane carries across the three sequential
    #     branch calls (reset_mechanism="subtract").
    mem = jnp.zeros((BATCH, FILTER_NUM), jnp.float32)
    spk_parts = []
    for j in range(len(FILTERS)):
        p = pooled[:, j * FILTER_NUM:(j + 1) * FILTER_NUM]
        reset = _spike(mem - THRESHOLD)          # spike test on pre-update membrane
        mem = BETA * mem + p - reset * THRESHOLD
        spk_parts.append(_spike(mem - THRESHOLD))
    spks1 = jnp.concatenate(spk_parts, axis=1)               # (BATCH, CTOT)

    # --- fc_1 + lif2 in f32 on the VPU/XLU (broadcast multiply + lane reduce)
    wfc = c_ref[R_WFC:R_WFC + LABEL_NUM, :]                  # (LABEL_NUM, CTOT)
    bfc = c_ref[R_BFC:R_BFC + 1, 0:LABEL_NUM]                # (1, LABEL_NUM)
    cols = [jnp.sum(spks1 * wfc[l:l + 1, :], axis=1, keepdims=True)
            for l in range(LABEL_NUM)]
    mem2 = jnp.concatenate(cols, axis=1) + bfc               # (BATCH, LABEL_NUM)
    spk2 = _spike(mem2 - THRESHOLD)

    # --- single lane-packed output slab: spks1 | spk2 | mem2 ----------------
    out_ref[...] = jnp.concatenate([spks1, spk2, mem2], axis=1)  # (BATCH, OUT_W)


def pack_consts(params):
    """Host-side: pack all weights/constants into ONE MXU/VPU-ready f32 slab."""
    w3, b3, w4, b4, w5, b5, wfc, bfc = params
    conv_ws = (w3, w4, w5)
    conv_bs = (b3, b4, b5)

    # im2col conv weight (KCOL, CTOT): tap-major rows, dead taps zero-padded.
    taps = []
    for i in range(MAX_FS):
        row = []
        for fs, w in zip(FILTERS, conv_ws):
            if i < fs:
                row.append(jnp.transpose(w[:, i, :]))                 # (H, F)
            else:
                row.append(jnp.zeros((HIDDEN, FILTER_NUM), jnp.float32))
        taps.append(jnp.concatenate(row, axis=1))                     # (H, CTOT)
    w_col = jnp.concatenate(taps, axis=0).astype(jnp.float32)         # (KCOL, CTOT)

    b_conv = jnp.concatenate([b.reshape(FILTER_NUM) for b in conv_bs]
                             ).astype(jnp.float32)                    # (CTOT,)

    # Pool weights: valid-position mask * 1/t_out, tiled per batch segment.
    poolw = np.zeros((M_ROWS, CTOT), np.float32)
    for j, fs in enumerate(FILTERS):
        t_out = SENT_LEN - fs + 1
        for b in range(BATCH):
            poolw[b * SENT_LEN:b * SENT_LEN + t_out,
                  j * FILTER_NUM:(j + 1) * FILTER_NUM] = 1.0 / t_out

    consts = jnp.zeros((CONST_ROWS, CTOT), jnp.float32)
    consts = consts.at[R_WCOL:R_WCOL + KCOL, :].set(w_col)
    consts = consts.at[R_POOL:R_POOL + M_ROWS, :].set(jnp.asarray(poolw))
    consts = consts.at[R_BCONV, :].set(b_conv)
    consts = consts.at[R_WFC:R_WFC + LABEL_NUM, :].set(wfc.astype(jnp.float32))
    consts = consts.at[R_BFC, 0:LABEL_NUM].set(
        bfc.reshape(LABEL_NUM).astype(jnp.float32))
    return consts


def snn_textcnn_forward(x, consts):
    # x: (BATCH, SENT_LEN, HIDDEN) f32 embedded sentences.
    x_flat = x.reshape(M_ROWS, HIDDEN)          # pure reshape, no duplication

    out = pl.pallas_call(
        snn_textcnn_kernel,
        out_shape=jax.ShapeDtypeStruct((BATCH, OUT_W), jnp.float32),
        in_specs=[
            pl.BlockSpec((M_ROWS, HIDDEN), lambda: (0, 0)),      # activations
            pl.BlockSpec((CONST_ROWS, CTOT), lambda: (0, 0)),    # packed constants
        ],
        out_specs=pl.BlockSpec((BATCH, OUT_W), lambda: (0, 0)),
        cost_estimate=pl.CostEstimate(
            flops=2 * M_ROWS * KCOL * CTOT + 2 * BATCH * CTOT * LABEL_NUM,
            transcendentals=0,
            bytes_accessed=(M_ROWS * HIDDEN + CONST_ROWS * CTOT
                            + BATCH * OUT_W) * 4),
    )(x_flat, consts)

    spks_1 = out[:, :CTOT]
    spk2 = out[:, CTOT:CTOT + LABEL_NUM]
    mem2 = out[:, CTOT + LABEL_NUM:]
    return spks_1, spk2, mem2


def init_params(key):
    ks = jax.random.split(key, 8)
    scale = 0.1
    w3 = scale * jax.random.normal(ks[0], (FILTER_NUM, FILTERS[0], HIDDEN), jnp.float32)
    b3 = scale * jax.random.normal(ks[1], (1, FILTER_NUM), jnp.float32)
    w4 = scale * jax.random.normal(ks[2], (FILTER_NUM, FILTERS[1], HIDDEN), jnp.float32)
    b4 = scale * jax.random.normal(ks[3], (1, FILTER_NUM), jnp.float32)
    w5 = scale * jax.random.normal(ks[4], (FILTER_NUM, FILTERS[2], HIDDEN), jnp.float32)
    b5 = scale * jax.random.normal(ks[5], (1, FILTER_NUM), jnp.float32)
    # nn.Linear weight convention: (out_features, in_features)
    wfc = scale * jax.random.normal(ks[6], (LABEL_NUM, len(FILTERS) * FILTER_NUM), jnp.float32)
    bfc = scale * jax.random.normal(ks[7], (1, LABEL_NUM), jnp.float32)
    return (w3, b3, w4, b4, w5, b5, wfc, bfc)


if __name__ == "__main__":
    key = jax.random.PRNGKey(0)
    k_x, k_p = jax.random.split(key)
    # Embedded sentence batch: (B, L, H)
    x = jax.random.normal(k_x, (BATCH, SENT_LEN, HIDDEN), jnp.float32)
    params = init_params(k_p)
    consts = pack_consts(params)     # one-time host-side constants packing

    fwd = jax.jit(snn_textcnn_forward)
    spks_1, spk2, mem2 = fwd(x, consts)
    jax.block_until_ready((spks_1, spk2, mem2))

    assert spks_1.shape == (BATCH, len(FILTERS) * FILTER_NUM)
    assert spk2.shape == (BATCH, LABEL_NUM)
    assert mem2.shape == (BATCH, LABEL_NUM)
    print("KERNEL_OK")
</pallas_src>

<mosaic_0001>
module attributes {stable_mosaic.version = 11 : i64} {
  func.func @snn_textcnn_kernel(%arg0: memref<32x32xf32, #tpu.memory_space<vmem>>, %arg1: memref<216x24xf32, #tpu.memory_space<vmem>>, %arg2: memref<2x32xf32, #tpu.memory_space<vmem>>) attributes {dimension_semantics = [], scalar_prefetch = 0 : i64, scratch_operands = 0 : i64, tpu.core_type = #tpu.core_type<tc>} {
    %c0 = arith.constant 0 : index
    %c0_0 = arith.constant 0 : index
    %0 = vector.load %arg0[%c0, %c0_0] : memref<32x32xf32, #tpu.memory_space<vmem>>, vector<32x32xf32>
    %cst = arith.constant 0.000000e+00 : f32
    %1 = vector.broadcast %cst : f32 to vector<32x24xf32>
    %c0_1 = arith.constant 0 : index
    %c0_2 = arith.constant 0 : index
    %2 = vector.load %arg1[%c0_1, %c0_2] : memref<216x24xf32, #tpu.memory_space<vmem>>, vector<32x24xf32>
    %cst_3 = arith.constant dense<0.000000e+00> : vector<32x24xf32>
    %3 = tpu.matmul %0, %2, %cst_3 {dimension_numbers = #tpu.dot_dimension_numbers<[1], [0], [0], [1], [0, 0, 1, 1], [], []>} : vector<32x32xf32>, vector<32x24xf32>, vector<32x24xf32> -> vector<32x24xf32>
    %4 = arith.addf %1, %3 : vector<32x24xf32>
    %5 = vector.extract_strided_slice %0 {offsets = [1, 0], sizes = [31, 32], strides = [1, 1]} : vector<32x32xf32> to vector<31x32xf32>
    %cst_4 = arith.constant 0.000000e+00 : f32
    %6 = vector.broadcast %cst_4 : f32 to vector<1x32xf32>
    %7 = tpu.concatenate %5, %6 in 0 : vector<31x32xf32>, vector<1x32xf32> -> vector<32x32xf32>
    %c32 = arith.constant 32 : index
    %c0_5 = arith.constant 0 : index
    %8 = vector.load %arg1[%c32, %c0_5] : memref<216x24xf32, #tpu.memory_space<vmem>>, vector<32x24xf32>
    %cst_6 = arith.constant dense<0.000000e+00> : vector<32x24xf32>
    %9 = tpu.matmul %7, %8, %cst_6 {dimension_numbers = #tpu.dot_dimension_numbers<[1], [0], [0], [1], [0, 0, 1, 1], [], []>} : vector<32x32xf32>, vector<32x24xf32>, vector<32x24xf32> -> vector<32x24xf32>
    %10 = arith.addf %4, %9 : vector<32x24xf32>
    %11 = vector.extract_strided_slice %0 {offsets = [2, 0], sizes = [30, 32], strides = [1, 1]} : vector<32x32xf32> to vector<30x32xf32>
    %cst_7 = arith.constant 0.000000e+00 : f32
    %12 = vector.broadcast %cst_7 : f32 to vector<2x32xf32>
    %13 = tpu.concatenate %11, %12 in 0 : vector<30x32xf32>, vector<2x32xf32> -> vector<32x32xf32>
    %c64 = arith.constant 64 : index
    %c0_8 = arith.constant 0 : index
    %14 = vector.load %arg1[%c64, %c0_8] : memref<216x24xf32, #tpu.memory_space<vmem>>, vector<32x24xf32>
    %cst_9 = arith.constant dense<0.000000e+00> : vector<32x24xf32>
    %15 = tpu.matmul %13, %14, %cst_9 {dimension_numbers = #tpu.dot_dimension_numbers<[1], [0], [0], [1], [0, 0, 1, 1], [], []>} : vector<32x32xf32>, vector<32x24xf32>, vector<32x24xf32> -> vector<32x24xf32>
    %16 = arith.addf %10, %15 : vector<32x24xf32>
    %17 = vector.extract_strided_slice %0 {offsets = [3, 0], sizes = [29, 32], strides = [1, 1]} : vector<32x32xf32> to vector<29x32xf32>
    %cst_10 = arith.constant 0.000000e+00 : f32
    %18 = vector.broadcast %cst_10 : f32 to vector<3x32xf32>
    %19 = tpu.concatenate %17, %18 in 0 : vector<29x32xf32>, vector<3x32xf32> -> vector<32x32xf32>
    %c96 = arith.constant 96 : index
    %c0_11 = arith.constant 0 : index
    %20 = vector.load %arg1[%c96, %c0_11] : memref<216x24xf32, #tpu.memory_space<vmem>>, vector<32x24xf32>
    %cst_12 = arith.constant dense<0.000000e+00> : vector<32x24xf32>
    %21 = tpu.matmul %19, %20, %cst_12 {dimension_numbers = #tpu.dot_dimension_numbers<[1], [0], [0], [1], [0, 0, 1, 1], [], []>} : vector<32x32xf32>, vector<32x24xf32>, vector<32x24xf32> -> vector<32x24xf32>
    %22 = arith.addf %16, %21 : vector<32x24xf32>
    %23 = vector.extract_strided_slice %0 {offsets = [4, 0], sizes = [28, 32], strides = [1, 1]} : vector<32x32xf32> to vector<28x32xf32>
    %cst_13 = arith.constant 0.000000e+00 : f32
    %24 = vector.broadcast %cst_13 : f32 to vector<4x32xf32>
    %25 = tpu.concatenate %23, %24 in 0 : vector<28x32xf32>, vector<4x32xf32> -> vector<32x32xf32>
    %c128 = arith.constant 128 : index
    %c0_14 = arith.constant 0 : index
    %26 = vector.load %arg1[%c128, %c0_14] : memref<216x24xf32, #tpu.memory_space<vmem>>, vector<32x24xf32>
    %cst_15 = arith.constant dense<0.000000e+00> : vector<32x24xf32>
    %27 = tpu.matmul %25, %26, %cst_15 {dimension_numbers = #tpu.dot_dimension_numbers<[1], [0], [0], [1], [0, 0, 1, 1], [], []>} : vector<32x32xf32>, vector<32x24xf32>, vector<32x24xf32> -> vector<32x24xf32>
    %28 = arith.addf %22, %27 : vector<32x24xf32>
    %c192 = arith.constant 192 : index
    %c0_16 = arith.constant 0 : index
    %29 = vector.load %arg1[%c192, %c0_16] : memref<216x24xf32, #tpu.memory_space<vmem>>, vector<1x24xf32>
    %30 = vector.broadcast %29 : vector<1x24xf32> to vector<32x24xf32>
    %31 = arith.addf %28, %30 : vector<32x24xf32>
    %cst_17 = arith.constant 5.000000e-01 : f32
    %32 = vector.broadcast %cst_17 : f32 to vector<32x24xf32>
    %33 = arith.subf %31, %32 : vector<32x24xf32>
    %cst_18 = arith.constant 0.000000e+00 : f32
    %34 = vector.broadcast %cst_18 : f32 to vector<32x24xf32>
    %35 = arith.cmpf ogt, %33, %34 : vector<32x24xf32>
    %cst_19 = arith.constant 1.000000e+00 : f32
    %cst_20 = arith.constant 0.000000e+00 : f32
    %36 = vector.broadcast %cst_19 : f32 to vector<32x24xf32>
    %37 = vector.broadcast %cst_20 : f32 to vector<32x24xf32>
    %38 = arith.select %35, %36, %37 : vector<32x24xi1>, vector<32x24xf32>
    %c160 = arith.constant 160 : index
    %c0_21 = arith.constant 0 : index
    %39 = vector.load %arg1[%c160, %c0_21] : memref<216x24xf32, #tpu.memory_space<vmem>>, vector<32x24xf32>
    %40 = arith.mulf %38, %39 : vector<32x24xf32>
    %41 = vector.extract_strided_slice %40 {offsets = [0, 0], sizes = [16, 24], strides = [1, 1]} : vector<32x24xf32> to vector<16x24xf32>
    %cst_22 = arith.constant dense<0.000000e+00> : vector<24xf32>
    %42 = vector.multi_reduction <add>, %41, %cst_22 [0] : vector<16x24xf32> to vector<24xf32>
    %43 = vector.shape_cast %42 : vector<24xf32> to vector<1x24xf32>
    %44 = vector.extract_strided_slice %40 {offsets = [16, 0], sizes = [16, 24], strides = [1, 1]} : vector<32x24xf32> to vector<16x24xf32>
    %cst_23 = arith.constant dense<0.000000e+00> : vector<24xf32>
    %45 = vector.multi_reduction <add>, %44, %cst_23 [0] : vector<16x24xf32> to vector<24xf32>
    %46 = vector.shape_cast %45 : vector<24xf32> to vector<1x24xf32>
    %47 = tpu.concatenate %43, %46 in 0 : vector<1x24xf32>, vector<1x24xf32> -> vector<2x24xf32>
    %cst_24 = arith.constant 0.000000e+00 : f32
    %48 = vector.broadcast %cst_24 : f32 to vector<2x8xf32>
    %49 = vector.extract_strided_slice %47 {offsets = [0, 0], sizes = [2, 8], strides = [1, 1]} : vector<2x24xf32> to vector<2x8xf32>
    %cst_25 = arith.constant 5.000000e-01 : f32
    %50 = vector.broadcast %cst_25 : f32 to vector<2x8xf32>
    %51 = arith.subf %48, %50 : vector<2x8xf32>
    %cst_26 = arith.constant 0.000000e+00 : f32
    %52 = vector.broadcast %cst_26 : f32 to vector<2x8xf32>
    %53 = arith.cmpf ogt, %51, %52 : vector<2x8xf32>
    %cst_27 = arith.constant 1.000000e+00 : f32
    %cst_28 = arith.constant 0.000000e+00 : f32
    %54 = vector.broadcast %cst_27 : f32 to vector<2x8xf32>
    %55 = vector.broadcast %cst_28 : f32 to vector<2x8xf32>
    %56 = arith.select %53, %54, %55 : vector<2x8xi1>, vector<2x8xf32>
    %cst_29 = arith.constant 0.899999976 : f32
    %57 = vector.broadcast %cst_29 : f32 to vector<2x8xf32>
    %58 = arith.mulf %57, %48 : vector<2x8xf32>
    %59 = arith.addf %58, %49 : vector<2x8xf32>
    %cst_30 = arith.constant 5.000000e-01 : f32
    %60 = vector.broadcast %cst_30 : f32 to vector<2x8xf32>
    %61 = arith.mulf %56, %60 : vector<2x8xf32>
    %62 = arith.subf %59, %61 : vector<2x8xf32>
    %cst_31 = arith.constant 5.000000e-01 : f32
    %63 = vector.broadcast %cst_31 : f32 to vector<2x8xf32>
    %64 = arith.subf %62, %63 : vector<2x8xf32>
    %cst_32 = arith.constant 0.000000e+00 : f32
    %65 = vector.broadcast %cst_32 : f32 to vector<2x8xf32>
    %66 = arith.cmpf ogt, %64, %65 : vector<2x8xf32>
    %cst_33 = arith.constant 1.000000e+00 : f32
    %cst_34 = arith.constant 0.000000e+00 : f32
    %67 = vector.broadcast %cst_33 : f32 to vector<2x8xf32>
    %68 = vector.broadcast %cst_34 : f32 to vector<2x8xf32>
    %69 = arith.select %66, %67, %68 : vector<2x8xi1>, vector<2x8xf32>
    %70 = vector.extract_strided_slice %47 {offsets = [0, 8], sizes = [2, 8], strides = [1, 1]} : vector<2x24xf32> to vector<2x8xf32>
    %cst_35 = arith.constant 5.000000e-01 : f32
    %71 = vector.broadcast %cst_35 : f32 to vector<2x8xf32>
    %72 = arith.subf %62, %71 : vector<2x8xf32>
    %cst_36 = arith.constant 0.000000e+00 : f32
    %73 = vector.broadcast %cst_36 : f32 to vector<2x8xf32>
    %74 = arith.cmpf ogt, %72, %73 : vector<2x8xf32>
    %cst_37 = arith.constant 1.000000e+00 : f32
    %cst_38 = arith.constant 0.000000e+00 : f32
    %75 = vector.broadcast %cst_37 : f32 to vector<2x8xf32>
    %76 = vector.broadcast %cst_38 : f32 to vector<2x8xf32>
    %77 = arith.select %74, %75, %76 : vector<2x8xi1>, vector<2x8xf32>
    %cst_39 = arith.constant 0.899999976 : f32
    %78 = vector.broadcast %cst_39 : f32 to vector<2x8xf32>
    %79 = arith.mulf %78, %62 : vector<2x8xf32>
    %80 = arith.addf %79, %70 : vector<2x8xf32>
    %cst_40 = arith.constant 5.000000e-01 : f32
    %81 = vector.broadcast %cst_40 : f32 to vector<2x8xf32>
    %82 = arith.mulf %77, %81 : vector<2x8xf32>
    %83 = arith.subf %80, %82 : vector<2x8xf32>
    %cst_41 = arith.constant 5.000000e-01 : f32
    %84 = vector.broadcast %cst_41 : f32 to vector<2x8xf32>
    %85 = arith.subf %83, %84 : vector<2x8xf32>
    %cst_42 = arith.constant 0.000000e+00 : f32
    %86 = vector.broadcast %cst_42 : f32 to vector<2x8xf32>
    %87 = arith.cmpf ogt, %85, %86 : vector<2x8xf32>
    %cst_43 = arith.constant 1.000000e+00 : f32
    %cst_44 = arith.constant 0.000000e+00 : f32
    %88 = vector.broadcast %cst_43 : f32 to vector<2x8xf32>
    %89 = vector.broadcast %cst_44 : f32 to vector<2x8xf32>
    %90 = arith.select %87, %88, %89 : vector<2x8xi1>, vector<2x8xf32>
    %91 = vector.extract_strided_slice %47 {offsets = [0, 16], sizes = [2, 8], strides = [1, 1]} : vector<2x24xf32> to vector<2x8xf32>
    %cst_45 = arith.constant 5.000000e-01 : f32
    %92 = vector.broadcast %cst_45 : f32 to vector<2x8xf32>
    %93 = arith.subf %83, %92 : vector<2x8xf32>
    %cst_46 = arith.constant 0.000000e+00 : f32
    %94 = vector.broadcast %cst_46 : f32 to vector<2x8xf32>
    %95 = arith.cmpf ogt, %93, %94 : vector<2x8xf32>
    %cst_47 = arith.constant 1.000000e+00 : f32
    %cst_48 = arith.constant 0.000000e+00 : f32
    %96 = vector.broadcast %cst_47 : f32 to vector<2x8xf32>
    %97 = vector.broadcast %cst_48 : f32 to vector<2x8xf32>
    %98 = arith.select %95, %96, %97 : vector<2x8xi1>, vector<2x8xf32>
    %cst_49 = arith.constant 0.899999976 : f32
    %99 = vector.broadcast %cst_49 : f32 to vector<2x8xf32>
    %100 = arith.mulf %99, %83 : vector<2x8xf32>
    %101 = arith.addf %100, %91 : vector<2x8xf32>
    %cst_50 = arith.constant 5.000000e-01 : f32
    %102 = vector.broadcast %cst_50 : f32 to vector<2x8xf32>
    %103 = arith.mulf %98, %102 : vector<2x8xf32>
    %104 = arith.subf %101, %103 : vector<2x8xf32>
    %cst_51 = arith.constant 5.000000e-01 : f32
    %105 = vector.broadcast %cst_51 : f32 to vector<2x8xf32>
    %106 = arith.subf %104, %105 : vector<2x8xf32>
    %cst_52 = arith.constant 0.000000e+00 : f32
    %107 = vector.broadcast %cst_52 : f32 to vector<2x8xf32>
    %108 = arith.cmpf ogt, %106, %107 : vector<2x8xf32>
    %cst_53 = arith.constant 1.000000e+00 : f32
    %cst_54 = arith.constant 0.000000e+00 : f32
    %109 = vector.broadcast %cst_53 : f32 to vector<2x8xf32>
    %110 = vector.broadcast %cst_54 : f32 to vector<2x8xf32>
    %111 = arith.select %108, %109, %110 : vector<2x8xi1>, vector<2x8xf32>
    %112 = tpu.concatenate %69, %90, %111 in 1 : vector<2x8xf32>, vector<2x8xf32>, vector<2x8xf32> -> vector<2x24xf32>
    %c200 = arith.constant 200 : index
    %c0_55 = arith.constant 0 : index
    %113 = vector.load %arg1[%c200, %c0_55] : memref<216x24xf32, #tpu.memory_space<vmem>>, vector<4x24xf32>
    %c208 = arith.constant 208 : index
    %c0_56 = arith.constant 0 : index
    %114 = vector.load %arg1[%c208, %c0_56] : memref<216x24xf32, #tpu.memory_space<vmem>>, vector<1x4xf32>
    %115 = vector.extract_strided_slice %113 {offsets = [0, 0], sizes = [1, 24], strides = [1, 1]} : vector<4x24xf32> to vector<1x24xf32>
    %116 = vector.broadcast %115 : vector<1x24xf32> to vector<2x24xf32>
    %117 = arith.mulf %112, %116 : vector<2x24xf32>
    %cst_57 = arith.constant dense<0.000000e+00> : vector<2xf32>
    %118 = vector.multi_reduction <add>, %117, %cst_57 [1] : vector<2x24xf32> to vector<2xf32>
    %119 = vector.shape_cast %118 : vector<2xf32> to vector<2x1xf32>
    %120 = vector.extract_strided_slice %113 {offsets = [1, 0], sizes = [1, 24], strides = [1, 1]} : vector<4x24xf32> to vector<1x24xf32>
    %121 = vector.broadcast %120 : vector<1x24xf32> to vector<2x24xf32>
    %122 = arith.mulf %112, %121 : vector<2x24xf32>
    %cst_58 = arith.constant dense<0.000000e+00> : vector<2xf32>
    %123 = vector.multi_reduction <add>, %122, %cst_58 [1] : vector<2x24xf32> to vector<2xf32>
    %124 = vector.shape_cast %123 : vector<2xf32> to vector<2x1xf32>
    %125 = vector.extract_strided_slice %113 {offsets = [2, 0], sizes = [1, 24], strides = [1, 1]} : vector<4x24xf32> to vector<1x24xf32>
    %126 = vector.broadcast %125 : vector<1x24xf32> to vector<2x24xf32>
    %127 = arith.mulf %112, %126 : vector<2x24xf32>
    %cst_59 = arith.constant dense<0.000000e+00> : vector<2xf32>
    %128 = vector.multi_reduction <add>, %127, %cst_59 [1] : vector<2x24xf32> to vector<2xf32>
    %129 = vector.shape_cast %128 : vector<2xf32> to vector<2x1xf32>
    %130 = vector.extract_strided_slice %113 {offsets = [3, 0], sizes = [1, 24], strides = [1, 1]} : vector<4x24xf32> to vector<1x24xf32>
    %131 = vector.broadcast %130 : vector<1x24xf32> to vector<2x24xf32>
    %132 = arith.mulf %112, %131 : vector<2x24xf32>
    %cst_60 = arith.constant dense<0.000000e+00> : vector<2xf32>
    %133 = vector.multi_reduction <add>, %132, %cst_60 [1] : vector<2x24xf32> to vector<2xf32>
    %134 = vector.shape_cast %133 : vector<2xf32> to vector<2x1xf32>
    %135 = tpu.concatenate %119, %124, %129, %134 in 1 : vector<2x1xf32>, vector<2x1xf32>, vector<2x1xf32>, vector<2x1xf32> -> vector<2x4xf32>
    %136 = vector.broadcast %114 : vector<1x4xf32> to vector<2x4xf32>
    %137 = arith.addf %135, %136 : vector<2x4xf32>
    %cst_61 = arith.constant 5.000000e-01 : f32
    %138 = vector.broadcast %cst_61 : f32 to vector<2x4xf32>
    %139 = arith.subf %137, %138 : vector<2x4xf32>
    %cst_62 = arith.constant 0.000000e+00 : f32
    %140 = vector.broadcast %cst_62 : f32 to vector<2x4xf32>
    %141 = arith.cmpf ogt, %139, %140 : vector<2x4xf32>
    %cst_63 = arith.constant 1.000000e+00 : f32
    %cst_64 = arith.constant 0.000000e+00 : f32
    %142 = vector.broadcast %cst_63 : f32 to vector<2x4xf32>
    %143 = vector.broadcast %cst_64 : f32 to vector<2x4xf32>
    %144 = arith.select %141, %142, %143 : vector<2x4xi1>, vector<2x4xf32>
    %145 = tpu.concatenate %112, %144, %137 in 1 : vector<2x24xf32>, vector<2x4xf32>, vector<2x4xf32> -> vector<2x32xf32>
    %c0_65 = arith.constant 0 : index
    %c0_66 = arith.constant 0 : index
    %146 = vector.load %arg2[%c0_65, %c0_66] : memref<2x32xf32, #tpu.memory_space<vmem>>, vector<2x32xf32>
    tpu.vector_store %arg2[%c0_65, %c0_66], %145 {strides = array<i32>} : memref<2x32xf32, #tpu.memory_space<vmem>>, vector<2x32xf32>,
    return
  }
}

</mosaic_0001>

<llo_original>
// kernel: snn_textcnn_forward.1
$region0: #{snn_textcnn_forward.1}
  #allocation0 [shape = 'u32[]', space=smem, size = 0x4, offset = 0x4, fixed_abs, tag = 'smem constant byte address 0x4 - core index']
  #allocation1 [shape = 'u32[144,128]{1,0:T(1,128)}', space=vmem, size = 0x12000, scoped, tag = 'internal scratch']
  %s0 = inlined_call_operand.vmem [shape: f32[32,32], index: 0, kind: input, shape index: {}]
  %s1 = inlined_call_operand.vmem [shape: f32[216,24], index: 1, kind: input, shape index: {}]
  %s2 = inlined_call_operand.vmem [shape: f32[2,32], index: 2, kind: output, shape index: {}]
  %s3 = sld [smem:[#allocation0]]
  $region18: #{snn_textcnn_forward.1} parent=0
    _
  %s5 = ssub.s32 1, %s3
  %s6 = scalar_select 0, %s5, %s3
  // Predicated region
  $region2: #{snn_textcnn_forward.1} parent=0 // pred_check
    _
  $region3: #{snn_textcnn_forward.1} parent=0 // pred_check_branch
    %8 = sbr.rel (0) target = $region5
  $region4: #{snn_textcnn_forward.1} parent=0 // pred_region
    _
  $region5: #{snn_textcnn_forward.1} parent=0 // pred_fallthru
    _
  // Predicated region
  $region6: #{snn_textcnn_forward.1} parent=0 // pred_check
    _
  $region7: #{snn_textcnn_forward.1} parent=0 // pred_check_branch
    %10 = sbr.rel (0) target = $region9
  $region8: #{snn_textcnn_forward.1} parent=0 // pred_region
    _
  $region9: #{snn_textcnn_forward.1} parent=0 // pred_fallthru
    _
  %v11 = vld [vmem:[%s0] sm:$0xff]
  %v12 = vld [vmem:[%s0 + $0x8] sm:$0xff]
  %v13 = vld [vmem:[%s0 + $0x10] sm:$0xff]
  %v14 = vld [vmem:[%s0 + $0x18] sm:$0xff]
  %v15 = vld [vmem:[%s1] sm:$0xff]
  %v16 = vld [vmem:[%s1 + $0x8] sm:$0xff]
  %v17 = vld [vmem:[%s1 + $0x10] sm:$0xff]
  %v18 = vld [vmem:[%s1 + $0x18] sm:$0xff]
  %vm23 = vcmask 1046528
  %v24 = vrot.slane %v11, 1
  %v25 = vrot.slane %v12, 1
  %v26 = vsel %vm23, %v24, %v25
  %v27 = vrot.slane %v13, 1
  %v28 = vsel %vm23, %v25, %v27
  %v29 = vrot.slane %v14, 1
  %v30 = vsel %vm23, %v27, %v29
  %v32 = vsel %vm23, %v29, 0.0
  %v33 = vld [vmem:[%s1 + $0x20] sm:$0xff]
  %v34 = vld [vmem:[%s1 + $0x28] sm:$0xff]
  %v35 = vld [vmem:[%s1 + $0x30] sm:$0xff]
  %v36 = vld [vmem:[%s1 + $0x38] sm:$0xff]
  %vm37 = vcmask 261120
  %v38 = vsel %vm37, %v26, 0
  %v40 = vsel %vm37, %v28, 0
  %v42 = vsel %vm37, %v30, 0
  %v45 = vsel %vm37, %v32, 0
  %47 = vmatprep.subr.mxu0 0.0
  %48 = vmatpush1.msra.mxu0 %v33
  %49 = vmatprep.subr.mxu0 0.0
  %50 = vmatpush1.msra.mxu0 %v34
  %51 = vmatprep.subr.mxu0 0.0
  %52 = vmatpush1.msra.mxu0 %v35
  %53 = vmatprep.subr.mxu0 0.0
  %54 = vmatpush1.msra.mxu0 %v36
  %55 = vmatprep.subr.mxu0 0.0
  %56 = vmatpush1.msra.mxu0 0.0
  %57 = vmatprep.subr.mxu0 0.0
  %58 = vmatpush1.msra.mxu0 0.0
  %59 = vmatprep.subr.mxu0 0.0
  %60 = vmatpush1.msra.mxu0 0.0
  %61 = vmatprep.subr.mxu0 0.0
  %62 = vmatpush1.msra.mxu0 0.0
  %63 = vmatprep.subr.mxu0 0.0
  %64 = vmatpush1.msra.mxu0 0.0
  %65 = vmatprep.subr.mxu0 0.0
  %66 = vmatpush1.msra.mxu0 0.0
  %67 = vmatprep.subr.mxu0 0.0
  %68 = vmatpush1.msra.mxu0 0.0
  %69 = vmatprep.subr.mxu0 0.0
  %70 = vmatpush1.msra.mxu0 0.0
  %71 = vmatprep.subr.mxu0 0.0
  %72 = vmatpush1.msra.mxu0 0.0
  %73 = vmatprep.subr.mxu0 0.0
  %74 = vmatpush1.msra.mxu0 0.0
  %75 = vmatprep.subr.mxu0 0.0
  %76 = vmatpush1.msra.mxu0 0.0
  %77 = vmatprep.subr.mxu0 0.0
  %78 = vmatpush1.msra.mxu0 0.0
  %79 = vmatprep.subr.mxu0 0.0
  %80 = vmatpush1.msra.mxu0 0.0
  %81 = vmatprep.subr.mxu0 0.0
  %82 = vmatpush1.msra.mxu0 0.0
  %83 = vmatprep.subr.mxu0 0.0
  %84 = vmatpush1.msra.mxu0 0.0
  %85 = vmatprep.subr.mxu0 0.0
  %86 = vmatpush1.msra.mxu0 0.0
  %87 = vmatprep.subr.mxu0 0.0
  %88 = vmatpush1.msra.mxu0 0.0
  %89 = vmatprep.subr.mxu0 0.0
  %90 = vmatpush1.msra.mxu0 0.0
  %91 = vmatprep.subr.mxu0 0.0
  %92 = vmatpush1.msra.mxu0 0.0
  %93 = vmatprep.subr.mxu0 0.0
  %94 = vmatpush1.msra.mxu0 0.0
  %95 = vmatprep.subr.mxu0 0.0
  %96 = vmatpush1.msra.mxu0 0.0
  %97 = vmatprep.subr.mxu0 0.0
  %98 = vmatpush1.msra.mxu0 0.0
  %99 = vmatprep.subr.mxu0 0.0
  %100 = vmatpush1.msra.mxu0 0.0
  %101 = vmatprep.subr.mxu0 0.0
  %102 = vmatpush1.msra.mxu0 0.0
  %103 = vmatprep.subr.mxu0 0.0
  %104 = vmatpush1.msra.mxu0 0.0
  %105 = vmatprep.subr.mxu0 0.0
  %106 = vmatpush1.msra.mxu0 0.0
  %107 = vmatprep.subr.mxu0 0.0
  %108 = vmatpush1.msra.mxu0 0.0
  %109 = vmatprep.subr.mxu0 0.0
  %110 = vmatpush1.msra.mxu0 0.0
  %111 = vmatprep.mubr.f32.mxu0 0.0
  %112 = vmatmul.mubr.f32.gmra.mrb[0].mxu0 %v38
  %v113 = vpop.f32.mrb[0].mxu0
  %v114 = vadd.f32 0.0, %v113
  %v115 = vpop.f32.mrb[0].mxu0
  %116 = vmatprep.mubr.f32.mxu0 0.0
  %117 = vmatmul.mubr.f32.gmra.mrb[0].mxu0 %v40
  %v118 = vpop.f32.mrb[0].mxu0
  %v119 = vadd.f32 0.0, %v118
  %v120 = vpop.f32.mrb[0].mxu0
  %121 = vmatprep.mubr.f32.mxu0 0.0
  %122 = vmatmul.mubr.f32.gmra.mrb[0].mxu0 %v42
  %v123 = vpop.f32.mrb[0].mxu0
  %v124 = vadd.f32 0.0, %v123
  %v125 = vpop.f32.mrb[0].mxu0
  %126 = vmatprep.mubr.f32.mxu0 0.0
  %127 = vmatmul.mubr.f32.gmra.mrb[0].mxu0 %v45
  %v128 = vpop.f32.mrb[0].mxu0
  %v129 = vadd.f32 0.0, %v128
  %v130 = vpop.f32.mrb[0].mxu0
  %131 = vdwg.mxu0
  %v132 = vsel %vm37, %v11, 0
  %v134 = vsel %vm37, %v12, 0
  %v136 = vsel %vm37, %v13, 0
  %v138 = vsel %vm37, %v14, 0
  %140 = vmatprep.subr.mxu0 0.0
  %141 = vmatpush1.msra.mxu0 %v15
  %142 = vmatprep.subr.mxu0 0.0
  %143 = vmatpush1.msra.mxu0 %v16
  %144 = vmatprep.subr.mxu0 0.0
  %145 = vmatpush1.msra.mxu0 %v17
  %146 = vmatprep.subr.mxu0 0.0
  %147 = vmatpush1.msra.mxu0 %v18
  %148 = vmatprep.subr.mxu0 0.0
  %149 = vmatpush1.msra.mxu0 0.0
  %150 = vmatprep.subr.mxu0 0.0
  %151 = vmatpush1.msra.mxu0 0.0
  %152 = vmatprep.subr.mxu0 0.0
  %153 = vmatpush1.msra.mxu0 0.0
  %154 = vmatprep.subr.mxu0 0.0
  %155 = vmatpush1.msra.mxu0 0.0
  %156 = vmatprep.subr.mxu0 0.0
  %157 = vmatpush1.msra.mxu0 0.0
  %158 = vmatprep.subr.mxu0 0.0
  %159 = vmatpush1.msra.mxu0 0.0
  %160 = vmatprep.subr.mxu0 0.0
  %161 = vmatpush1.msra.mxu0 0.0
  %162 = vmatprep.subr.mxu0 0.0
  %163 = vmatpush1.msra.mxu0 0.0
  %164 = vmatprep.subr.mxu0 0.0
  %165 = vmatpush1.msra.mxu0 0.0
  %166 = vmatprep.subr.mxu0 0.0
  %167 = vmatpush1.msra.mxu0 0.0
  %168 = vmatprep.subr.mxu0 0.0
  %169 = vmatpush1.msra.mxu0 0.0
  %170 = vmatprep.subr.mxu0 0.0
  %171 = vmatpush1.msra.mxu0 0.0
  %172 = vmatprep.subr.mxu0 0.0
  %173 = vmatpush1.msra.mxu0 0.0
  %174 = vmatprep.subr.mxu0 0.0
  %175 = vmatpush1.msra.mxu0 0.0
  %176 = vmatprep.subr.mxu0 0.0
  %177 = vmatpush1.msra.mxu0 0.0
  %178 = vmatprep.subr.mxu0 0.0
  %179 = vmatpush1.msra.mxu0 0.0
  %180 = vmatprep.subr.mxu0 0.0
  %181 = vmatpush1.msra.mxu0 0.0
  %182 = vmatprep.subr.mxu0 0.0
  %183 = vmatpush1.msra.mxu0 0.0
  %184 = vmatprep.subr.mxu0 0.0
  %185 = vmatpush1.msra.mxu0 0.0
  %186 = vmatprep.subr.mxu0 0.0
  %187 = vmatpush1.msra.mxu0 0.0
  %188 = vmatprep.subr.mxu0 0.0
  %189 = vmatpush1.msra.mxu0 0.0
  %190 = vmatprep.subr.mxu0 0.0
  %191 = vmatpush1.msra.mxu0 0.0
  %192 = vmatprep.subr.mxu0 0.0
  %193 = vmatpush1.msra.mxu0 0.0
  %194 = vmatprep.subr.mxu0 0.0
  %195 = vmatpush1.msra.mxu0 0.0
  %196 = vmatprep.subr.mxu0 0.0
  %197 = vmatpush1.msra.mxu0 0.0
  %198 = vmatprep.subr.mxu0 0.0
  %199 = vmatpush1.msra.mxu0 0.0
  %200 = vmatprep.subr.mxu0 0.0
  %201 = vmatpush1.msra.mxu0 0.0
  %202 = vmatprep.subr.mxu0 0.0
  %203 = vmatpush1.msra.mxu0 0.0
  %204 = vmatprep.mubr.f32.mxu0 0.0
  %205 = vmatmul.mubr.f32.gmra.mrb[0].mxu0 %v132
  %v206 = vpop.f32.mrb[0].mxu0
  %v207 = vadd.f32 %v114, %v206
  %v208 = vpop.f32.mrb[0].mxu0
  %209 = vmatprep.mubr.f32.mxu0 0.0
  %210 = vmatmul.mubr.f32.gmra.mrb[0].mxu0 %v134
  %v211 = vpop.f32.mrb[0].mxu0
  %v212 = vadd.f32 %v119, %v211
  %v213 = vpop.f32.mrb[0].mxu0
  %214 = vmatprep.mubr.f32.mxu0 0.0
  %215 = vmatmul.mubr.f32.gmra.mrb[0].mxu0 %v136
  %v216 = vpop.f32.mrb[0].mxu0
  %v217 = vadd.f32 %v124, %v216
  %v218 = vpop.f32.mrb[0].mxu0
  %219 = vmatprep.mubr.f32.mxu0 0.0
  %220 = vmatmul.mubr.f32.gmra.mrb[0].mxu0 %v138
  %v221 = vpop.f32.mrb[0].mxu0
  %v222 = vadd.f32 %v129, %v221
  %v223 = vpop.f32.mrb[0].mxu0
  %224 = vdwg.mxu0
  %vm225 = vcmask 1045504
  %v226 = vrot.slane %v11, 2
  %v227 = vrot.slane %v12, 2
  %v228 = vsel %vm225, %v226, %v227
  %v229 = vrot.slane %v13, 2
  %v230 = vsel %vm225, %v227, %v229
  %v231 = vrot.slane %v14, 2
  %v232 = vsel %vm225, %v229, %v231
  %v234 = vsel %vm225, %v231, 0.0
  %v235 = vld [vmem:[%s1 + $0x40] sm:$0xff]
  %v236 = vld [vmem:[%s1 + $0x48] sm:$0xff]
  %v237 = vld [vmem:[%s1 + $0x50] sm:$0xff]
  %v238 = vld [vmem:[%s1 + $0x58] sm:$0xff]
  %v239 = vsel %vm37, %v228, 0
  %v241 = vsel %vm37, %v230, 0
  %v243 = vsel %vm37, %v232, 0
  %v246 = vsel %vm37, %v234, 0
  %248 = vmatprep.subr.mxu0 0.0
  %249 = vmatpush1.msra.mxu0 %v235
  %250 = vmatprep.subr.mxu0 0.0
  %251 = vmatpush1.msra.mxu0 %v236
  %252 = vmatprep.subr.mxu0 0.0
  %253 = vmatpush1.msra.mxu0 %v237
  %254 = vmatprep.subr.mxu0 0.0
  %255 = vmatpush1.msra.mxu0 %v238
  %256 = vmatprep.subr.mxu0 0.0
  %257 = vmatpush1.msra.mxu0 0.0
  %258 = vmatprep.subr.mxu0 0.0
  %259 = vmatpush1.msra.mxu0 0.0
  %260 = vmatprep.subr.mxu0 0.0
  %261 = vmatpush1.msra.mxu0 0.0
  %262 = vmatprep.subr.mxu0 0.0
  %263 = vmatpush1.msra.mxu0 0.0
  %264 = vmatprep.subr.mxu0 0.0
  %265 = vmatpush1.msra.mxu0 0.0
  %266 = vmatprep.subr.mxu0 0.0
  %267 = vmatpush1.msra.mxu0 0.0
  %268 = vmatprep.subr.mxu0 0.0
  %269 = vmatpush1.msra.mxu0 0.0
  %270 = vmatprep.subr.mxu0 0.0
  %271 = vmatpush1.msra.mxu0 0.0
  %272 = vmatprep.subr.mxu0 0.0
  %273 = vmatpush1.msra.mxu0 0.0
  %274 = vmatprep.subr.mxu0 0.0
  %275 = vmatpush1.msra.mxu0 0.0
  %276 = vmatprep.subr.mxu0 0.0
  %277 = vmatpush1.msra.mxu0 0.0
  %278 = vmatprep.subr.mxu0 0.0
  %279 = vmatpush1.msra.mxu0 0.0
  %280 = vmatprep.subr.mxu0 0.0
  %281 = vmatpush1.msra.mxu0 0.0
  %282 = vmatprep.subr.mxu0 0.0
  %283 = vmatpush1.msra.mxu0 0.0
  %284 = vmatprep.subr.mxu0 0.0
  %285 = vmatpush1.msra.mxu0 0.0
  %286 = vmatprep.subr.mxu0 0.0
  %287 = vmatpush1.msra.mxu0 0.0
  %288 = vmatprep.subr.mxu0 0.0
  %289 = vmatpush1.msra.mxu0 0.0
  %290 = vmatprep.subr.mxu0 0.0
  %291 = vmatpush1.msra.mxu0 0.0
  %292 = vmatprep.subr.mxu0 0.0
  %293 = vmatpush1.msra.mxu0 0.0
  %294 = vmatprep.subr.mxu0 0.0
  %295 = vmatpush1.msra.mxu0 0.0
  %296 = vmatprep.subr.mxu0 0.0
  %297 = vmatpush1.msra.mxu0 0.0
  %298 = vmatprep.subr.mxu0 0.0
  %299 = vmatpush1.msra.mxu0 0.0
  %300 = vmatprep.subr.mxu0 0.0
  %301 = vmatpush1.msra.mxu0 0.0
  %302 = vmatprep.subr.mxu0 0.0
  %303 = vmatpush1.msra.mxu0 0.0
  %304 = vmatprep.subr.mxu0 0.0
  %305 = vmatpush1.msra.mxu0 0.0
  %306 = vmatprep.subr.mxu0 0.0
  %307 = vmatpush1.msra.mxu0 0.0
  %308 = vmatprep.subr.mxu0 0.0
  %309 = vmatpush1.msra.mxu0 0.0
  %310 = vmatprep.subr.mxu0 0.0
  %311 = vmatpush1.msra.mxu0 0.0
  %312 = vmatprep.mubr.f32.mxu0 0.0
  %313 = vmatmul.mubr.f32.gmra.mrb[0].mxu0 %v239
  %v314 = vpop.f32.mrb[0].mxu0
  %v315 = vadd.f32 0.0, %v314
  %v316 = vpop.f32.mrb[0].mxu0
  %317 = vmatprep.mubr.f32.mxu0 0.0
  %318 = vmatmul.mubr.f32.gmra.mrb[0].mxu0 %v241
  %v319 = vpop.f32.mrb[0].mxu0
  %v320 = vadd.f32 0.0, %v319
  %v321 = vpop.f32.mrb[0].mxu0
  %322 = vmatprep.mubr.f32.mxu0 0.0
  %323 = vmatmul.mubr.f32.gmra.mrb[0].mxu0 %v243
  %v324 = vpop.f32.mrb[0].mxu0
  %v325 = vadd.f32 0.0, %v324
  %v326 = vpop.f32.mrb[0].mxu0
  %327 = vmatprep.mubr.f32.mxu0 0.0
  %328 = vmatmul.mubr.f32.gmra.mrb[0].mxu0 %v246
  %v329 = vpop.f32.mrb[0].mxu0
  %v330 = vadd.f32 0.0, %v329
  %v331 = vpop.f32.mrb[0].mxu0
  %332 = vdwg.mxu0
  %v333 = vadd.f32 %v207, %v315
  %v334 = vadd.f32 %v212, %v320
  %v335 = vadd.f32 %v217, %v325
  %v336 = vadd.f32 %v222, %v330
  %vm337 = vcmask 1044480
  %v338 = vrot.slane %v11, 3
  %v339 = vrot.slane %v12, 3
  %v340 = vsel %vm337, %v338, %v339
  %v341 = vrot.slane %v13, 3
  %v342 = vsel %vm337, %v339, %v341
  %v343 = vrot.slane %v14, 3
  %v344 = vsel %vm337, %v341, %v343
  %v346 = vsel %vm337, %v343, 0.0
  %v347 = vld [vmem:[%s1 + $0x60] sm:$0xff]
  %v348 = vld [vmem:[%s1 + $0x68] sm:$0xff]
  %v349 = vld [vmem:[%s1 + $0x70] sm:$0xff]
  %v350 = vld [vmem:[%s1 + $0x78] sm:$0xff]
  %v351 = vsel %vm37, %v340, 0
  %v353 = vsel %vm37, %v342, 0
  %v355 = vsel %vm37, %v344, 0
  %v358 = vsel %vm37, %v346, 0
  %360 = vmatprep.subr.mxu0 0.0
  %361 = vmatpush1.msra.mxu0 %v347
  %362 = vmatprep.subr.mxu0 0.0
  %363 = vmatpush1.msra.mxu0 %v348
  %364 = vmatprep.subr.mxu0 0.0
  %365 = vmatpush1.msra.mxu0 %v349
  %366 = vmatprep.subr.mxu0 0.0
  %367 = vmatpush1.msra.mxu0 %v350
  %368 = vmatprep.subr.mxu0 0.0
  %369 = vmatpush1.msra.mxu0 0.0
  %370 = vmatprep.subr.mxu0 0.0
  %371 = vmatpush1.msra.mxu0 0.0
  %372 = vmatprep.subr.mxu0 0.0
  %373 = vmatpush1.msra.mxu0 0.0
  %374 = vmatprep.subr.mxu0 0.0
  %375 = vmatpush1.msra.mxu0 0.0
  %376 = vmatprep.subr.mxu0 0.0
  %377 = vmatpush1.msra.mxu0 0.0
  %378 = vmatprep.subr.mxu0 0.0
  %379 = vmatpush1.msra.mxu0 0.0
  %380 = vmatprep.subr.mxu0 0.0
  %381 = vmatpush1.msra.mxu0 0.0
  %382 = vmatprep.subr.mxu0 0.0
  %383 = vmatpush1.msra.mxu0 0.0
  %384 = vmatprep.subr.mxu0 0.0
  %385 = vmatpush1.msra.mxu0 0.0
  %386 = vmatprep.subr.mxu0 0.0
  %387 = vmatpush1.msra.mxu0 0.0
  %388 = vmatprep.subr.mxu0 0.0
  %389 = vmatpush1.msra.mxu0 0.0
  %390 = vmatprep.subr.mxu0 0.0
  %391 = vmatpush1.msra.mxu0 0.0
  %392 = vmatprep.subr.mxu0 0.0
  %393 = vmatpush1.msra.mxu0 0.0
  %394 = vmatprep.subr.mxu0 0.0
  %395 = vmatpush1.msra.mxu0 0.0
  %396 = vmatprep.subr.mxu0 0.0
  %397 = vmatpush1.msra.mxu0 0.0
  %398 = vmatprep.subr.mxu0 0.0
  %399 = vmatpush1.msra.mxu0 0.0
  %400 = vmatprep.subr.mxu0 0.0
  %401 = vmatpush1.msra.mxu0 0.0
  %402 = vmatprep.subr.mxu0 0.0
  %403 = vmatpush1.msra.mxu0 0.0
  %404 = vmatprep.subr.mxu0 0.0
  %405 = vmatpush1.msra.mxu0 0.0
  %406 = vmatprep.subr.mxu0 0.0
  %407 = vmatpush1.msra.mxu0 0.0
  %408 = vmatprep.subr.mxu0 0.0
  %409 = vmatpush1.msra.mxu0 0.0
  %410 = vmatprep.subr.mxu0 0.0
  %411 = vmatpush1.msra.mxu0 0.0
  %412 = vmatprep.subr.mxu0 0.0
  %413 = vmatpush1.msra.mxu0 0.0
  %414 = vmatprep.subr.mxu0 0.0
  %415 = vmatpush1.msra.mxu0 0.0
  %416 = vmatprep.subr.mxu0 0.0
  %417 = vmatpush1.msra.mxu0 0.0
  %418 = vmatprep.subr.mxu0 0.0
  %419 = vmatpush1.msra.mxu0 0.0
  %420 = vmatprep.subr.mxu0 0.0
  %421 = vmatpush1.msra.mxu0 0.0
  %422 = vmatprep.subr.mxu0 0.0
  %423 = vmatpush1.msra.mxu0 0.0
  %424 = vmatprep.mubr.f32.mxu0 0.0
  %425 = vmatmul.mubr.f32.gmra.mrb[0].mxu0 %v351
  %v426 = vpop.f32.mrb[0].mxu0
  %v427 = vadd.f32 0.0, %v426
  %v428 = vpop.f32.mrb[0].mxu0
  %429 = vmatprep.mubr.f32.mxu0 0.0
  %430 = vmatmul.mubr.f32.gmra.mrb[0].mxu0 %v353
  %v431 = vpop.f32.mrb[0].mxu0
  %v432 = vadd.f32 0.0, %v431
  %v433 = vpop.f32.mrb[0].mxu0
  %434 = vmatprep.mubr.f32.mxu0 0.0
  %435 = vmatmul.mubr.f32.gmra.mrb[0].mxu0 %v355
  %v436 = vpop.f32.mrb[0].mxu0
  %v437 = vadd.f32 0.0, %v436
  %v438 = vpop.f32.mrb[0].mxu0
  %439 = vmatprep.mubr.f32.mxu0 0.0
  %440 = vmatmul.mubr.f32.gmra.mrb[0].mxu0 %v358
  %v441 = vpop.f32.mrb[0].mxu0
  %v442 = vadd.f32 0.0, %v441
  %v443 = vpop.f32.mrb[0].mxu0
  %444 = vdwg.mxu0
  %v445 = vadd.f32 %v333, %v427
  %v446 = vadd.f32 %v334, %v432
  %v447 = vadd.f32 %v335, %v437
  %v448 = vadd.f32 %v336, %v442
  %vm449 = vcmask 1043456
  %v450 = vrot.slane %v11, 4
  %v451 = vrot.slane %v12, 4
  %v452 = vsel %vm449, %v450, %v451
  %v453 = vrot.slane %v13, 4
  %v454 = vsel %vm449, %v451, %v453
  %v455 = vrot.slane %v14, 4
  %v456 = vsel %vm449, %v453, %v455
  %v458 = vsel %vm449, %v455, 0.0
  %v459 = vld [vmem:[%s1 + $0x80] sm:$0xff]
  %v460 = vld [vmem:[%s1 + $0x88] sm:$0xff]
  %v461 = vld [vmem:[%s1 + $0x90] sm:$0xff]
  %v462 = vld [vmem:[%s1 + $0x98] sm:$0xff]
  %v463 = vsel %vm37, %v452, 0
  %v465 = vsel %vm37, %v454, 0
  %v467 = vsel %vm37, %v456, 0
  %v470 = vsel %vm37, %v458, 0
  %472 = vmatprep.subr.mxu0 0.0
  %473 = vmatpush1.msra.mxu0 %v459
  %474 = vmatprep.subr.mxu0 0.0
  %475 = vmatpush1.msra.mxu0 %v460
  %476 = vmatprep.subr.mxu0 0.0
  %477 = vmatpush1.msra.mxu0 %v461
  %478 = vmatprep.subr.mxu0 0.0
  %479 = vmatpush1.msra.mxu0 %v462
  %480 = vmatprep.subr.mxu0 0.0
  %481 = vmatpush1.msra.mxu0 0.0
  %482 = vmatprep.subr.mxu0 0.0
  %483 = vmatpush1.msra.mxu0 0.0
  %484 = vmatprep.subr.mxu0 0.0
  %485 = vmatpush1.msra.mxu0 0.0
  %486 = vmatprep.subr.mxu0 0.0
  %487 = vmatpush1.msra.mxu0 0.0
  %488 = vmatprep.subr.mxu0 0.0
  %489 = vmatpush1.msra.mxu0 0.0
  %490 = vmatprep.subr.mxu0 0.0
  %491 = vmatpush1.msra.mxu0 0.0
  %492 = vmatprep.subr.mxu0 0.0
  %493 = vmatpush1.msra.mxu0 0.0
  %494 = vmatprep.subr.mxu0 0.0
  %495 = vmatpush1.msra.mxu0 0.0
  %496 = vmatprep.subr.mxu0 0.0
  %497 = vmatpush1.msra.mxu0 0.0
  %498 = vmatprep.subr.mxu0 0.0
  %499 = vmatpush1.msra.mxu0 0.0
  %500 = vmatprep.subr.mxu0 0.0
  %501 = vmatpush1.msra.mxu0 0.0
  %502 = vmatprep.subr.mxu0 0.0
  %503 = vmatpush1.msra.mxu0 0.0
  %504 = vmatprep.subr.mxu0 0.0
  %505 = vmatpush1.msra.mxu0 0.0
  %506 = vmatprep.subr.mxu0 0.0
  %507 = vmatpush1.msra.mxu0 0.0
  %508 = vmatprep.subr.mxu0 0.0
  %509 = vmatpush1.msra.mxu0 0.0
  %510 = vmatprep.subr.mxu0 0.0
  %511 = vmatpush1.msra.mxu0 0.0
  %512 = vmatprep.subr.mxu0 0.0
  %513 = vmatpush1.msra.mxu0 0.0
  %514 = vmatprep.subr.mxu0 0.0
  %515 = vmatpush1.msra.mxu0 0.0
  %516 = vmatprep.subr.mxu0 0.0
  %517 = vmatpush1.msra.mxu0 0.0
  %518 = vmatprep.subr.mxu0 0.0
  %519 = vmatpush1.msra.mxu0 0.0
  %520 = vmatprep.subr.mxu0 0.0
  %521 = vmatpush1.msra.mxu0 0.0
  %522 = vmatprep.subr.mxu0 0.0
  %523 = vmatpush1.msra.mxu0 0.0
  %524 = vmatprep.subr.mxu0 0.0
  %525 = vmatpush1.msra.mxu0 0.0
  %526 = vmatprep.subr.mxu0 0.0
  %527 = vmatpush1.msra.mxu0 0.0
  %528 = vmatprep.subr.mxu0 0.0
  %529 = vmatpush1.msra.mxu0 0.0
  %530 = vmatprep.subr.mxu0 0.0
  %531 = vmatpush1.msra.mxu0 0.0
  %532 = vmatprep.subr.mxu0 0.0
  %533 = vmatpush1.msra.mxu0 0.0
  %534 = vmatprep.subr.mxu0 0.0
  %535 = vmatpush1.msra.mxu0 0.0
  %536 = vmatprep.mubr.f32.mxu0 0.0
  %537 = vmatmul.mubr.f32.gmra.mrb[0].mxu0 %v463
  %v538 = vpop.f32.mrb[0].mxu0
  %v539 = vadd.f32 0.0, %v538
  %v540 = vpop.f32.mrb[0].mxu0
  %541 = vmatprep.mubr.f32.mxu0 0.0
  %542 = vmatmul.mubr.f32.gmra.mrb[0].mxu0 %v465
  %v543 = vpop.f32.mrb[0].mxu0
  %v544 = vadd.f32 0.0, %v543
  %v545 = vpop.f32.mrb[0].mxu0
  %546 = vmatprep.mubr.f32.mxu0 0.0
  %547 = vmatmul.mubr.f32.gmra.mrb[0].mxu0 %v467
  %v548 = vpop.f32.mrb[0].mxu0
  %v549 = vadd.f32 0.0, %v548
  %v550 = vpop.f32.mrb[0].mxu0
  %551 = vmatprep.mubr.f32.mxu0 0.0
  %552 = vmatmul.mubr.f32.gmra.mrb[0].mxu0 %v470
  %v553 = vpop.f32.mrb[0].mxu0
  %v554 = vadd.f32 0.0, %v553
  %v555 = vpop.f32.mrb[0].mxu0
  %556 = vdwg.mxu0
  %v557 = vadd.f32 %v445, %v539
  %v558 = vadd.f32 %v446, %v544
  %v559 = vadd.f32 %v447, %v549
  %v560 = vadd.f32 %v448, %v554
  %v561 = vld [vmem:[%s1 + $0xc0] sm:$0x1]
  %v562 = vlaneseq
  %v563 = vshrl.u32 %v562, 7
  %v564 = vsub.s32 0, %v563
  %v565 = vrot.slane %v561, %v564
  %v566 = vadd.f32 %v557, %v565
  %v567 = vadd.f32 %v558, %v565
  %v568 = vadd.f32 %v559, %v565
  %v569 = vadd.f32 %v560, %v565
  %v570 = vsub.f32 %v566, 0.5
  %v571 = vsub.f32 %v567, 0.5
  %v572 = vsub.f32 %v568, 0.5
  %v573 = vsub.f32 %v569, 0.5
  %vm574 = vcmp.gt.f32.partialorder %v570, 0.0
  %vm575 = vcmp.gt.f32.partialorder %v571, 0.0
  %vm576 = vcmp.gt.f32.partialorder %v572, 0.0
  %vm577 = vcmp.gt.f32.partialorder %v573, 0.0
  %v578 = vsel %vm574, 1.0, 0.0
  %v579 = vsel %vm575, 1.0, 0.0
  %v580 = vsel %vm576, 1.0, 0.0
  %v581 = vsel %vm577, 1.0, 0.0
  %v582 = vld [vmem:[%s1 + $0xa0] sm:$0xff]
  %v583 = vld [vmem:[%s1 + $0xa8] sm:$0xff]
  %v584 = vld [vmem:[%s1 + $0xb0] sm:$0xff]
  %v585 = vld [vmem:[%s1 + $0xb8] sm:$0xff]
  %v586 = vmul.f32 %v578, %v582
  %v587 = vmul.f32 %v579, %v583
  %v588 = vmul.f32 %v580, %v584
  %v589 = vmul.f32 %v581, %v585
  %vm590 = vcmask 195584
  %v591 = vsel %vm590, %v586, 0.0
  %v592 = vsel %vm590, %v587, 0.0
  %v593 = vadd.f32 %v591, %v592
  %v594 = vrot.slane %v593, 4
  %v595 = vadd.f32 %v593, %v594
  %v596 = vrot.slane %v595, 2
  %v597 = vadd.f32 %v595, %v596
  %v598 = vrot.slane %v597, 1
  %v599 = vadd.f32 %v597, %v598
  %v600 = vsel %vm590, %v588, 0.0
  %v601 = vsel %vm590, %v589, 0.0
  %v602 = vadd.f32 %v600, %v601
  %v603 = vrot.slane %v602, 4
  %v604 = vadd.f32 %v602, %v603
  %v605 = vrot.slane %v604, 2
  %v606 = vadd.f32 %v604, %v605
  %v607 = vrot.slane %v606, 1
  %v608 = vadd.f32 %v606, %v607
  %vm609 = vcmask 1040384
  %v610 = vsel %vm609, %v599, %v608
  %vm611 = vcmp.gt.f32.partialorder -0.5, 0.0
  %v612 = vsel %vm611, 1.0, 0.0
  %v613 = vadd.f32 %v610, 0.0
  %v614 = vmul.f32 %v612, 0.5
  %v615 = vsub.f32 %v613, %v614
  %v616 = vsub.f32 %v615, 0.5
  %vm617 = vcmp.gt.f32.partialorder %v616, 0.0
  %v618 = vsel %vm617, 1.0, 0.0
  %v619 = vmul.f32 %v615, 0.9
  %621 = vrot.lane.b32.xlu0 %v610, 120
  %v622 = vpop.permute.xlu0 %621
  %v624 = vadd.f32 %v619, %v622
  %v625 = vmul.f32 %v618, 0.5
  %v626 = vsub.f32 %v624, %v625
  %v627 = vsub.f32 %v626, 0.5
  %vm628 = vcmp.gt.f32.partialorder %v627, 0.0
  %v629 = vsel %vm628, 1.0, 0.0
  %v630 = vmul.f32 %v626, 0.9
  %631 = vrot.lane.b32.xlu0 %v610, 112
  %v632 = vpop.permute.xlu0 %631
  %v634 = vadd.f32 %v630, %v632
  %v635 = vmul.f32 %v629, 0.5
  %v636 = vsub.f32 %v634, %v635
  %v637 = vsub.f32 %v636, 0.5
  %vm638 = vcmp.gt.f32.partialorder %v637, 0.0
  %v639 = vsel %vm638, 1.0, 0.0
  %641 = vrot.lane.b32.xlu0 %v629, 8
  %v642 = vpop.permute.xlu0 %641
  %645 = vrot.lane.b32.xlu0 %v639, 16
  %v646 = vpop.permute.xlu0 %645
  %vm648 = vcmask 64512
  %v649 = vsel %vm648, %v618, %v642
  %vm650 = vcmask 130048
  %v651 = vsel %vm650, %v649, %v646
  %v652 = vld [vmem:[%s1 + $0xc8] sm:$0xf]
  %v653 = vld [vmem:[%s1 + $0xd0] sm:$0x1]
  %v654 = vlaneseq
  %v655 = vshrl.u32 %v654, 7
  %v656 = vsub.s32 0, %v655
  %v657 = vrot.slane %v652, %v656
  %v658 = vmul.f32 %v651, %v657
  %vm659 = vcmask 189440
  %v660 = vsel %vm659, %v658, 0.0
  %661 = vadd.xlane.f32.xlu0 %v660
  %v662 = vpop.xlane.xlu0 %661
  %v663 = vlaneseq
  %v664 = vshrl.u32 %v663, 7
  %v665 = vsub.s32 1, %v664
  %v666 = vrot.slane %v652, %v665
  %v667 = vmul.f32 %v651, %v666
  %v668 = vsel %vm659, %v667, 0.0
  %669 = vadd.xlane.f32.xlu0 %v668
  %v670 = vpop.xlane.xlu0 %669
  %v671 = vlaneseq
  %v672 = vshrl.u32 %v671, 7
  %v673 = vsub.s32 2, %v672
  %v674 = vrot.slane %v652, %v673
  %v675 = vmul.f32 %v651, %v674
  %v676 = vsel %vm659, %v675, 0.0
  %677 = vadd.xlane.f32.xlu0 %v676
  %v678 = vpop.xlane.xlu0 %677
  %v679 = vlaneseq
  %v680 = vshrl.u32 %v679, 7
  %v681 = vsub.s32 3, %v680
  %v682 = vrot.slane %v652, %v681
  %v683 = vmul.f32 %v651, %v682
  %v684 = vsel %vm659, %v683, 0.0
  %685 = vadd.xlane.f32.xlu0 %v684
  %v686 = vpop.xlane.xlu0 %685
  %vm687 = vcmask 7168
  %v688 = vsel %vm687, %v662, %v670
  %vm689 = vcmask 15360
  %v690 = vsel %vm689, %v688, %v678
  %vm691 = vcmask 23552
  %v692 = vsel %vm691, %v690, %v686
  %v693 = vlaneseq
  %v694 = vshrl.u32 %v693, 7
  %v695 = vsub.s32 0, %v694
  %v696 = vrot.slane %v653, %v695
  %v697 = vadd.f32 %v692, %v696
  %v698 = vsub.f32 %v697, 0.5
  %vm699 = vcmp.gt.f32.partialorder %v698, 0.0
  %v700 = vsel %vm699, 1.0, 0.0
  %702 = vrot.lane.b32.xlu0 %v700, 24
  %v703 = vpop.permute.xlu0 %702
  %706 = vrot.lane.b32.xlu0 %v697, 28
  %v707 = vpop.permute.xlu0 %706
  %v709 = vsel %vm590, %v651, %v703
  %vm710 = vcmask 228352
  %v711 = vsel %vm710, %v709, %v707
  %vm712 = vcmask 254976
  %713 = vst.msk [vmem:[%s2] sm:$0x3] %vm712, %v711
  // Predicated region
  $region10: #{snn_textcnn_forward.1} parent=0 // pred_check
    _
  $region11: #{snn_textcnn_forward.1} parent=0 // pred_check_branch
    %715 = sbr.rel (0) target = $region13
  $region12: #{snn_textcnn_forward.1} parent=0 // pred_region
    _
  $region13: #{snn_textcnn_forward.1} parent=0 // pred_fallthru
    _
  // Predicated region
  $region14: #{snn_textcnn_forward.1} parent=0 // pred_check
    _
  $region15: #{snn_textcnn_forward.1} parent=0 // pred_check_branch
    %717 = sbr.rel (0) target = $region17
  $region16: #{snn_textcnn_forward.1} parent=0 // pred_region
    _
  $region17: #{snn_textcnn_forward.1} parent=0 // pred_fallthru
    _

</llo_original>
